<compile_context>
chip_gen: v6e
topology: v6e:2x2x1
jax: 0.10.0
libtpu: 0.0.40
codegen_flags: <defaults>
</compile_context>

<pallas_src>
import functools

import jax
import jax.numpy as jnp
from jax.experimental import pallas as pl
from jax.experimental.pallas import tpu as pltpu

_EPS = 1e-5          # nn.InstanceNorm2d default eps
_MXU_DTYPE = None    # set to jnp.bfloat16 on v6e/v7x for 2x MXU rate and half
                     # the A/W DMA bytes; kept f32 here for numerical fidelity
                     # (review: negligible at 16x16).


# ------------------------------ Pallas kernels ------------------------------ #

def _conv_gemm_kernel(*refs, epilogue, has_residual):
    """Fused conv GEMM:  out = epilogue(W @ patches + bias [, residual])."""
    if has_residual:
        p_ref, w_ref, b_ref, r_ref, o_ref = refs
    else:
        p_ref, w_ref, b_ref, o_ref = refs
        r_ref = None

    w = w_ref[...]                       # (C_out, K)   channels on sublanes
    p = p_ref[0]                         # (K, S)       spatial on lanes
    acc = jnp.dot(w, p, preferred_element_type=jnp.float32)   # (C_out, S)
    acc = acc + b_ref[...]               # (C_out, 1) broadcast over lanes

    if epilogue in ("in", "in_relu", "in_res"):
        # InstanceNorm over the spatial (lane) axis, biased variance (PyTorch).
        mu = jnp.mean(acc, axis=1, keepdims=True)
        xc = acc - mu
        var = jnp.mean(xc * xc, axis=1, keepdims=True)
        y = xc * jax.lax.rsqrt(var + _EPS)
        if epilogue == "in_relu":
            y = jnp.maximum(y, 0.0)
        elif epilogue == "in_res":
            y = y + r_ref[0]             # residual:  x + IN(conv(...))
    elif epilogue == "tanh":
        y = jnp.tanh(acc)
    else:
        y = acc
    o_ref[0] = y.astype(o_ref.dtype)


def pallas_conv_gemm(patches, w_g, bias, epilogue=None, residual=None):
    """patches: (N, K, S), w_g: (C_out, K), bias: (C_out,) -> (N, C_out, S)."""
    N, K, S = patches.shape
    C_out = w_g.shape[0]
    if _MXU_DTYPE is not None:
        patches = patches.astype(_MXU_DTYPE)
        w_g = w_g.astype(_MXU_DTYPE)
    args = [patches, w_g, bias.reshape(C_out, 1).astype(jnp.float32)]
    in_specs = [
        pl.BlockSpec((1, K, S), lambda n: (n, 0, 0)),
        pl.BlockSpec((C_out, K), lambda n: (0, 0)),
        pl.BlockSpec((C_out, 1), lambda n: (0, 0)),
    ]
    if residual is not None:
        args.append(residual)
        in_specs.append(pl.BlockSpec((1, C_out, S), lambda n: (n, 0, 0)))
    kern = functools.partial(_conv_gemm_kernel, epilogue=epilogue,
                             has_residual=residual is not None)
    return pl.pallas_call(
        kern,
        out_shape=jax.ShapeDtypeStruct((N, C_out, S), jnp.float32),
        grid=(N,),
        in_specs=in_specs,
        out_specs=pl.BlockSpec((1, C_out, S), lambda n: (n, 0, 0)),
        compiler_params=pltpu.CompilerParams(dimension_semantics=("parallel",)),
    )(*args)


def _in_act_kernel(x_ref, o_ref, *, act):
    x = x_ref[0]                               # (C, S)  spatial on lanes
    mu = jnp.mean(x, axis=1, keepdims=True)
    xc = x - mu
    var = jnp.mean(xc * xc, axis=1, keepdims=True)
    y = xc * jax.lax.rsqrt(var + _EPS)
    if act:
        y = jnp.maximum(y, 0.0)
    o_ref[0] = y.astype(o_ref.dtype)


def pallas_instance_norm(x_ncs, act):
    """x: (N, C, S) -> InstanceNorm(+ReLU); reduction over the lane (S) axis."""
    N, C, S = x_ncs.shape
    kern = functools.partial(_in_act_kernel, act=act)
    return pl.pallas_call(
        kern,
        out_shape=jax.ShapeDtypeStruct((N, C, S), jnp.float32),
        grid=(N,),
        in_specs=[pl.BlockSpec((1, C, S), lambda n: (n, 0, 0))],
        out_specs=pl.BlockSpec((1, C, S), lambda n: (n, 0, 0)),
        compiler_params=pltpu.CompilerParams(dimension_semantics=("parallel",)),
    )(x_ncs)


# --------------------------- conv glue (indexing only) ----------------------- #

def _patches_cmajor(xp, k, stride, Ho, Wo):
    """Padded NCHW -> (N, k*k*C, Ho*Wo) patches, K ordered (dh, dw, c_in)."""
    N, C, _, _ = xp.shape
    cols = []
    for dh in range(k):
        for dw in range(k):
            sl = xp[:, :, dh:dh + stride * Ho:stride, dw:dw + stride * Wo:stride]
            cols.append(sl.reshape(N, C, Ho * Wo))
    return jnp.concatenate(cols, axis=1)


def conv2d_block(x_nchw, w_oihw, bias, stride, pad, epilogue, residual=None):
    """Conv2d(padding_mode='reflect') with the full epilogue fused in-kernel."""
    N, C_in, H, W = x_nchw.shape
    if pad > 0:
        x_nchw = jnp.pad(x_nchw, ((0, 0), (0, 0), (pad, pad), (pad, pad)),
                         mode="reflect")   # every Conv2d in the module is reflect
    k = w_oihw.shape[2]
    Ho = (H + 2 * pad - k) // stride + 1
    Wo = (W + 2 * pad - k) // stride + 1
    patches = _patches_cmajor(x_nchw, k, stride, Ho, Wo)           # (N, K, S)
    w_g = jnp.transpose(w_oihw, (0, 2, 3, 1)).reshape(w_oihw.shape[0], -1)
    res = None
    if residual is not None:
        res = residual.reshape(N, residual.shape[1], Ho * Wo)
    out = pallas_conv_gemm(patches, w_g, bias, epilogue=epilogue, residual=res)
    return out.reshape(N, -1, Ho, Wo)


# (phase parity, 2x2 tap) -> index into the 3-wide transposed-conv kernel.
_PHASE_TAP_TO_K = {(0, 0): 1, (1, 0): 2, (1, 1): 0}


def conv_transpose2d_block(x_nchw, w_iokk, bias):
    """ConvTranspose2d(k=3, stride=2, pad=1, output_padding=1) + IN + ReLU via
    stride-phase decomposition: one GEMM on 2x2 patches of the undilated input
    produces all 4 output phases; then pixel-shuffle + fused IN+ReLU."""
    N, C_in, H, W = x_nchw.shape
    C_out = w_iokk.shape[1]
    assert w_iokk.shape[2] == 3, "decomposition assumes k=3, s=2, p=1, op=1"

    # 2x2 patches of the input, zero-padded by one row/col at bottom/right.
    xz = jnp.pad(x_nchw, ((0, 0), (0, 0), (0, 1), (0, 1)))
    patches = _patches_cmajor(xz, 2, 1, H, W)                  # (N, 4*C_in, H*W)

    # Phase weight (4*C_out, 4*C_in): row = (ph*2+pw)*C_out + c_out,
    #                                 col = (dh*2+dw)*C_in + c_in.
    wg = jnp.zeros((4, C_out, 2, 2, C_in), dtype=w_iokk.dtype)
    for ph in range(2):
        for pw in range(2):
            for dh in range(2):
                for dw in range(2):
                    kh = _PHASE_TAP_TO_K.get((ph, dh))
                    kw = _PHASE_TAP_TO_K.get((pw, dw))
                    if kh is None or kw is None:
                        continue
                    wg = wg.at[ph * 2 + pw, :, dh, dw, :].set(
                        jnp.transpose(w_iokk[:, :, kh, kw]))
    wg = wg.reshape(4 * C_out, 4 * C_in)
    bias4 = jnp.tile(bias, 4)                                  # bias per phase

    out = pallas_conv_gemm(patches, wg, bias4, epilogue=None)  # (N, 4*C_out, H*W)

    # Pixel-shuffle phases back into space: (N, C_out, 2H, 2W).
    y = out.reshape(N, 2, 2, C_out, H, W)
    y = jnp.transpose(y, (0, 3, 4, 1, 5, 2)).reshape(N, C_out, 2 * H, 2 * W)

    # Fused lane-dense InstanceNorm + ReLU over the full 2H*2W spatial extent.
    y = pallas_instance_norm(y.reshape(N, C_out, 4 * H * W), act=True)
    return y.reshape(N, C_out, 2 * H, 2 * W)


# --------------------------- Cycle_Generator forward ------------------------- #

def cycle_generator_forward(params, num_residuals, x_nchw):
    # initial: Conv7 reflect + IN + ReLU (fully fused)
    y = conv2d_block(x_nchw, params["init_w"], params["init_b"],
                     stride=1, pad=3, epilogue="in_relu")
    # down blocks: Conv3 s2 reflect + IN + ReLU
    for i in range(2):
        y = conv2d_block(y, params[f"down{i}_w"], params[f"down{i}_b"],
                         stride=2, pad=1, epilogue="in_relu")
    # residual blocks: 2 fused pallas_calls each
    for i in range(num_residuals):
        r = y
        t = conv2d_block(y, params[f"res{i}_w1"], params[f"res{i}_b1"],
                         stride=1, pad=1, epilogue="in_relu")
        y = conv2d_block(t, params[f"res{i}_w2"], params[f"res{i}_b2"],
                         stride=1, pad=1, epilogue="in_res", residual=r)
    # up blocks: stride-phase ConvTranspose3 s2 + IN + ReLU
    for i in range(2):
        y = conv_transpose2d_block(y, params[f"up{i}_w"], params[f"up{i}_b"])
    # last: Conv7 reflect + tanh (tanh fused into the GEMM epilogue)
    y = conv2d_block(y, params["last_w"], params["last_b"],
                     stride=1, pad=3, epilogue="tanh")
    return y                                   # NCHW, matching PyTorch


def make_params(key, img_channels=3, F=8, num_residuals=2):
    params = {}

    def nxt():
        nonlocal key
        key, sub = jax.random.split(key)
        return sub

    def rnd(shape):
        return jax.random.normal(nxt(), shape, jnp.float32) * 0.05

    params["init_w"] = rnd((F, img_channels, 7, 7)); params["init_b"] = rnd((F,))
    params["down0_w"] = rnd((2 * F, F, 3, 3));       params["down0_b"] = rnd((2 * F,))
    params["down1_w"] = rnd((4 * F, 2 * F, 3, 3));   params["down1_b"] = rnd((4 * F,))
    for i in range(num_residuals):
        params[f"res{i}_w1"] = rnd((4 * F, 4 * F, 3, 3))
        params[f"res{i}_b1"] = rnd((4 * F,))
        params[f"res{i}_w2"] = rnd((4 * F, 4 * F, 3, 3))
        params[f"res{i}_b2"] = rnd((4 * F,))
    # ConvTranspose2d weights are (in_channels, out_channels, k, k)
    params["up0_w"] = rnd((4 * F, 2 * F, 3, 3));     params["up0_b"] = rnd((2 * F,))
    params["up1_w"] = rnd((2 * F, F, 3, 3));         params["up1_b"] = rnd((F,))
    params["last_w"] = rnd((img_channels, F, 7, 7)); params["last_b"] = rnd((img_channels,))
    return params


if __name__ == "__main__":
    key = jax.random.PRNGKey(0)
    kp, kx = jax.random.split(key)

    img_channels, num_features, num_residuals = 3, 8, 2
    params = make_params(kp, img_channels, num_features, num_residuals)

    x = jax.random.normal(kx, (2, img_channels, 16, 16), jnp.float32)
    out = cycle_generator_forward(params, num_residuals, x)
    out = jax.block_until_ready(out)

    assert out.shape == (2, img_channels, 16, 16), out.shape
    assert bool(jnp.all(jnp.isfinite(out)))
    assert bool(jnp.all(jnp.abs(out) <= 1.0))  # tanh output range
    print("KERNEL_OK")
</pallas_src>

<mosaic_0001>
module attributes {stable_mosaic.version = 11 : i64} {
  func.func @_conv_gemm_kernel(%arg0: i32, %arg1: memref<1x147x256xf32, #tpu.memory_space<vmem>>, %arg2: memref<8x147xf32, #tpu.memory_space<vmem>>, %arg3: memref<8x1xf32, #tpu.memory_space<vmem>>, %arg4: memref<1x8x256xf32, #tpu.memory_space<vmem>>) attributes {dimension_semantics = [#tpu.dimension_semantics<parallel>], iteration_bounds = array<i64: 2>, scalar_prefetch = 0 : i64, scratch_operands = 0 : i64, tpu.core_type = #tpu.core_type<tc>, window_params = [{transform_indices = @transform_0, window_bounds = array<i64: 1, 147, 256>}, {pipeline_mode = #tpu.pipeline_mode<synchronous>, transform_indices = @transform_1, window_bounds = array<i64: 8, 147>}, {pipeline_mode = #tpu.pipeline_mode<synchronous>, transform_indices = @transform_2, window_bounds = array<i64: 8, 1>}, {transform_indices = @transform_3, window_bounds = array<i64: 1, 8, 256>}]} {
    %c0 = arith.constant 0 : index
    %c0_0 = arith.constant 0 : index
    %0 = vector.load %arg2[%c0, %c0_0] : memref<8x147xf32, #tpu.memory_space<vmem>>, vector<8x147xf32>
    %c0_1 = arith.constant 0 : index
    %c0_2 = arith.constant 0 : index
    %c0_3 = arith.constant 0 : index
    %1 = vector.load %arg1[%c0_1, %c0_2, %c0_3] : memref<1x147x256xf32, #tpu.memory_space<vmem>>, vector<1x147x256xf32>
    %2 = vector.shape_cast %1 : vector<1x147x256xf32> to vector<147x256xf32>
    %cst = arith.constant dense<0.000000e+00> : vector<8x256xf32>
    %3 = tpu.matmul %0, %2, %cst {dimension_numbers = #tpu.dot_dimension_numbers<[1], [0], [0], [1], [0, 0, 1, 1], [], []>} : vector<8x147xf32>, vector<147x256xf32>, vector<8x256xf32> -> vector<8x256xf32>
    %c0_4 = arith.constant 0 : index
    %c0_5 = arith.constant 0 : index
    %4 = vector.load %arg3[%c0_4, %c0_5] : memref<8x1xf32, #tpu.memory_space<vmem>>, vector<8x1xf32>
    %5 = vector.broadcast %4 : vector<8x1xf32> to vector<8x256xf32>
    %6 = arith.addf %3, %5 : vector<8x256xf32>
    %cst_6 = arith.constant dense<0.000000e+00> : vector<8xf32>
    %7 = vector.multi_reduction <add>, %6, %cst_6 [1] : vector<8x256xf32> to vector<8xf32>
    %8 = vector.shape_cast %7 : vector<8xf32> to vector<8x1xf32>
    %cst_7 = arith.constant 2.560000e+02 : f32
    %9 = vector.broadcast %cst_7 : f32 to vector<8x1xf32>
    %10 = arith.divf %8, %9 : vector<8x1xf32>
    %11 = vector.broadcast %10 : vector<8x1xf32> to vector<8x256xf32>
    %12 = arith.subf %6, %11 : vector<8x256xf32>
    %13 = arith.mulf %12, %12 : vector<8x256xf32>
    %cst_8 = arith.constant dense<0.000000e+00> : vector<8xf32>
    %14 = vector.multi_reduction <add>, %13, %cst_8 [1] : vector<8x256xf32> to vector<8xf32>
    %15 = vector.shape_cast %14 : vector<8xf32> to vector<8x1xf32>
    %cst_9 = arith.constant 2.560000e+02 : f32
    %16 = vector.broadcast %cst_9 : f32 to vector<8x1xf32>
    %17 = arith.divf %15, %16 : vector<8x1xf32>
    %cst_10 = arith.constant 9.99999974E-6 : f32
    %18 = vector.broadcast %cst_10 : f32 to vector<8x1xf32>
    %19 = arith.addf %17, %18 : vector<8x1xf32>
    %20 = math.rsqrt %19 : vector<8x1xf32>
    %21 = vector.broadcast %20 : vector<8x1xf32> to vector<8x256xf32>
    %22 = arith.mulf %12, %21 : vector<8x256xf32>
    %cst_11 = arith.constant 0.000000e+00 : f32
    %23 = vector.broadcast %cst_11 : f32 to vector<8x256xf32>
    %24 = arith.maximumf %22, %23 : vector<8x256xf32>
    %c0_12 = arith.constant 0 : index
    %c0_13 = arith.constant 0 : index
    %c0_14 = arith.constant 0 : index
    %25 = vector.load %arg4[%c0_12, %c0_13, %c0_14] : memref<1x8x256xf32, #tpu.memory_space<vmem>>, vector<1x8x256xf32>
    %26 = vector.shape_cast %25 : vector<1x8x256xf32> to vector<8x256xf32>
    %27 = vector.shape_cast %24 : vector<8x256xf32> to vector<1x8x256xf32>
    tpu.vector_store %arg4[%c0_12, %c0_13, %c0_14], %27 {strides = array<i32>} : memref<1x8x256xf32, #tpu.memory_space<vmem>>, vector<1x8x256xf32>,
    return
  }
  func.func @transform_0(%arg0: i32) -> (i32, i32, i32) {
    %c0_i32 = arith.constant 0 : i32
    %c0_i32_0 = arith.constant 0 : i32
    %c0_i32_1 = arith.constant 0 : i32
    return %arg0, %c0_i32, %c0_i32_0 : i32, i32, i32
  }
  func.func @transform_1(%arg0: i32) -> (i32, i32) {
    %c0_i32 = arith.constant 0 : i32
    %c0_i32_0 = arith.constant 0 : i32
    %c0_i32_1 = arith.constant 0 : i32
    return %c0_i32, %c0_i32_0 : i32, i32
  }
  func.func @transform_2(%arg0: i32) -> (i32, i32) {
    %c0_i32 = arith.constant 0 : i32
    %c0_i32_0 = arith.constant 0 : i32
    %c0_i32_1 = arith.constant 0 : i32
    return %c0_i32, %c0_i32_0 : i32, i32
  }
  func.func @transform_3(%arg0: i32) -> (i32, i32, i32) {
    %c0_i32 = arith.constant 0 : i32
    %c0_i32_0 = arith.constant 0 : i32
    %c0_i32_1 = arith.constant 0 : i32
    return %arg0, %c0_i32, %c0_i32_0 : i32, i32, i32
  }
}

</mosaic_0001>

<llo_original>
// kernel: tpu_custom_call.1
$region0: #{tpu_custom_call.1}
  #allocation0 [shape = 'u32[]', space=smem, size = 0x4, offset = 0x4, fixed_abs, tag = 'smem constant byte address 0x4 - core index']
  #allocation1 [shape = 'u32[144,128]{1,0:T(1,128)}', space=vmem, size = 0x12000, scoped, tag = 'internal scratch']
  %s0 = inlined_call_operand.vmem [shape: f32[2,147,256], index: 0, kind: input, shape index: {}]
  %s1 = inlined_call_operand.vmem [shape: f32[8,147], index: 1, kind: input, shape index: {}]
  %s2 = inlined_call_operand.vmem [shape: f32[8,1], index: 2, kind: input, shape index: {}]
  %s3 = inlined_call_operand.hbm [shape: f32[2,8,256], index: 3, kind: output, shape index: {}]
  %s4 = sld [smem:[#allocation0]]
  $region45: #{tpu_custom_call.1} parent=0
    _
  %s6 = ssub.s32 1, %s4
  %s7 = scalar_select 0, %s6, %s4
  $region1: #{tpu_custom_call.1} parent=0
    #allocation2 [shape = 'u8[16384]{0}', space=vmem, size = 0x4000, scoped, tag = 'output window, operand 0']
    #allocation3 [shape = 's32[2]{0}', space=sflag, size = 0x8, scoped, tag = 'scoped memory for tpu_custom_call.1']
    %8 = vsyncpa [#allocation3], 0
    %s9 = scalar_lea.sflag [#allocation3], 1
    %10 = vsyncpa %s9, 0
    loop: start=0, step=1, limit=4
    $region2: #{tpu_custom_call.1} parent=1 // loop_pre_header
      _
    $region3: #{tpu_custom_call.1} parent=1 // loop_header
      %s12 = sphi 0, %s16
      %p13 = scmp.ge.s32.totalorder %s12, 4
      %s22 = sphi 0, %s24
      %s25 = sphi 0, %s22
      %s26 = sphi 0, %s25
      %s42 = sphi 0, %s26
      %s46 = sphi 0, %s46
      %s48 = sphi 0, %s46
      %s49 = sphi 0, %s48
      %s63 = sphi 0, %s49
      %s67 = sphi 0, %s67
      %s69 = sphi 0, %s67
      %s70 = sphi 0, %s69
      %s84 = sphi 0, %s70
      %s90 = sphi 0, %s92
      %s93 = sphi 0, %s90
      %s94 = sphi 0, %s93
      %s110 = sphi 0, %s94
    $region4: #{tpu_custom_call.1} parent=1 // loop_header_branch
      %15 = sbr.rel (%p13) target = $region8
    $region5: #{tpu_custom_call.1} parent=1 // loop_body
      %s17 = ssub.s32 %s12, 1
      %s18 = ssub.s32 %s12, 2
      %s19 = sadd.s32 %s12, 1
      %s20 = ssub.s32 %s12, %s19
      %p21 = scmp.eq.s32.totalorder %s20, 0
      %s23 = sadd.s32 %s22, 1
      %s24 = scalar_select %p21, %s22, %s23
      %p27 = pneg %p21
      %p28 = scmp.eq.s32.totalorder %s12, 1
      %p29 = por %p27, %p28
      %p30 = scmp.ne.s32.totalorder %s22, %s25
      %p31 = scmp.eq.s32.totalorder %s12, 0
      %p32 = por %p30, %p31
      %p33 = scmp.ne.s32.totalorder %s22, %s25
      %p34 = scmp.eq.s32.totalorder %s17, 1
      %p35 = por %p33, %p34
      %p36 = scmp.ne.s32.totalorder %s25, %s26
      %p37 = scmp.eq.s32.totalorder %s17, 0
      %p38 = por %p36, %p37
      %p39 = scmp.ne.s32.totalorder %s25, %s26
      %p40 = scmp.eq.s32.totalorder %s18, 1
      %p41 = por %p39, %p40
      %p43 = scmp.ne.s32.totalorder %s26, %s42
      %p44 = scmp.eq.s32.totalorder %s18, 0
      %p45 = por %p43, %p44
      %s47 = sadd.s32 %s46, 1
      %p50 = scmp.eq.s32.totalorder %s12, 1
      %p51 = scmp.ne.s32.totalorder %s46, %s48
      %p52 = scmp.eq.s32.totalorder %s12, 0
      %p53 = por %p51, %p52
      %p54 = scmp.ne.s32.totalorder %s46, %s48
      %p55 = scmp.eq.s32.totalorder %s17, 1
      %p56 = por %p54, %p55
      %p57 = scmp.ne.s32.totalorder %s48, %s49
      %p58 = scmp.eq.s32.totalorder %s17, 0
      %p59 = por %p57, %p58
      %p60 = scmp.ne.s32.totalorder %s48, %s49
      %p61 = scmp.eq.s32.totalorder %s18, 1
      %p62 = por %p60, %p61
      %p64 = scmp.ne.s32.totalorder %s49, %s63
      %p65 = scmp.eq.s32.totalorder %s18, 0
      %p66 = por %p64, %p65
      %s68 = sadd.s32 %s67, 1
      %p71 = scmp.eq.s32.totalorder %s12, 1
      %p72 = scmp.ne.s32.totalorder %s67, %s69
      %p73 = scmp.eq.s32.totalorder %s12, 0
      %p74 = por %p72, %p73
      %p75 = scmp.ne.s32.totalorder %s67, %s69
      %p76 = scmp.eq.s32.totalorder %s17, 1
      %p77 = por %p75, %p76
      %p78 = scmp.ne.s32.totalorder %s69, %s70
      %p79 = scmp.eq.s32.totalorder %s17, 0
      %p80 = por %p78, %p79
      %p81 = scmp.ne.s32.totalorder %s69, %s70
      %p82 = scmp.eq.s32.totalorder %s18, 1
      %p83 = por %p81, %p82
      %p85 = scmp.ne.s32.totalorder %s70, %s84
      %p86 = scmp.eq.s32.totalorder %s18, 0
      %p87 = por %p85, %p86
      %s88 = ssub.s32 %s12, %s19
      %p89 = scmp.eq.s32.totalorder %s88, 0
      %s91 = sadd.s32 %s90, 1
      %s92 = scalar_select %p89, %s90, %s91
      %p95 = pneg %p89
      %p96 = scmp.eq.s32.totalorder %s12, 1
      %p97 = por %p95, %p96
      %p98 = scmp.ne.s32.totalorder %s90, %s93
      %p99 = scmp.eq.s32.totalorder %s12, 0
      %p100 = por %p98, %p99
      %p101 = scmp.ne.s32.totalorder %s90, %s93
      %p102 = scmp.eq.s32.totalorder %s17, 1
      %p103 = por %p101, %p102
      %p104 = scmp.ne.s32.totalorder %s93, %s94
      %p105 = scmp.eq.s32.totalorder %s17, 0
      %p106 = por %p104, %p105
      %p107 = scmp.ne.s32.totalorder %s93, %s94
      %p108 = scmp.eq.s32.totalorder %s18, 1
      %p109 = por %p107, %p108
      %p111 = scmp.ne.s32.totalorder %s94, %s110
      %p112 = scmp.eq.s32.totalorder %s18, 0
      %p113 = por %p111, %p112
      %p114 = scmp.le.s32.totalorder 1, %s12
      %p115 = scmp.lt.s32.totalorder %s12, 3
      %p116 = pnand %p114, %p115
      %p117 = pneg %p116
      // Predicated region
      $region9: #{tpu_custom_call.1} parent=5 // pred_check
        _
      $region10: #{tpu_custom_call.1} parent=5 // pred_check_branch
        %119 = sbr.rel (%p116) target = $region12
      $region11: #{tpu_custom_call.1} parent=5 // pred_region
        %s120 = ssub.s32 %s12, 1
        // Predicated region
        $region13: #{tpu_custom_call.1} parent=11 // pred_check
          %p121 = pneg %p59
        $region14: #{tpu_custom_call.1} parent=11 // pred_check_branch
          %123 = sbr.rel (%p121) target = $region16
        $region15: #{tpu_custom_call.1} parent=11 // pred_region
          _
        $region16: #{tpu_custom_call.1} parent=11 // pred_fallthru
          _
        // Predicated region
        $region17: #{tpu_custom_call.1} parent=11 // pred_check
          %p124 = pneg %p80
        $region18: #{tpu_custom_call.1} parent=11 // pred_check_branch
          %126 = sbr.rel (%p124) target = $region20
        $region19: #{tpu_custom_call.1} parent=11 // pred_region
          _
        $region20: #{tpu_custom_call.1} parent=11 // pred_fallthru
          _
      $region12: #{tpu_custom_call.1} parent=5 // pred_fallthru
        _
      %p127 = scmp.lt.s32.totalorder %s12, 2
      // Predicated region
      $region21: #{tpu_custom_call.1} parent=5 // pred_check
        %p128 = pneg %p127
      $region22: #{tpu_custom_call.1} parent=5 // pred_check_branch
        %130 = sbr.rel (%p128) target = $region24
      $region23: #{tpu_custom_call.1} parent=5 // pred_region
        // Predicated region
        $region25: #{tpu_custom_call.1} parent=23 // pred_check
          %p131 = pneg %p32
        $region26: #{tpu_custom_call.1} parent=23 // pred_check_branch
          %133 = sbr.rel (%p131) target = $region28
        $region27: #{tpu_custom_call.1} parent=23 // pred_region
          %p134 = scmp.lt.s32.totalorder %s12, 1
          %s135 = scalar_select %p134, %s12, 1
          %s136 = smul.addr %s135, 38
          %s137 = smul.addr %s136, 8
          %s138 = scalar_lea.vmem %s0, %s137
        $region28: #{tpu_custom_call.1} parent=23 // pred_fallthru
          _
      $region24: #{tpu_custom_call.1} parent=5 // pred_fallthru
        _
      %p139 = scmp.le.s32.totalorder 1, %s12
      %p140 = scmp.lt.s32.totalorder %s12, 3
      %p141 = pnand %p139, %p140
      %p142 = pneg %p141
      // Predicated region
      $region29: #{tpu_custom_call.1} parent=5 // pred_check
        _
      $region30: #{tpu_custom_call.1} parent=5 // pred_check_branch
        %144 = sbr.rel (%p141) target = $region32
      $region31: #{tpu_custom_call.1} parent=5 // pred_region
        %s145 = ssub.s32 %s12, 1
        %p146 = scmp.lt.s32.totalorder %s17, 1
        %s147 = scalar_select %p146, %s17, 1
        %s148 = smul.addr %s147, 38
        %s149 = smul.addr %s148, 8
        %s150 = scalar_lea.vmem %s0, %s149
        %p151 = pneg %p38
        %p152 = pneg %p35
        %p153 = pneg %p59
        %p154 = pneg %p56
        %p155 = pneg %p80
        %p156 = pneg %p77
        %p157 = pneg %p106
        %p158 = pneg %p103
        %s159 = sand.u32 %s93, 1
        %s160 = scalar_lea.sflag [#allocation3], %s159
        %s161 = sand.u32 %s93, 1
        %s162 = smul.addr %s161, 16
        %s163 = scalar_lea.vmem [#allocation2], %s162
        %p164 = scmp.lt.s32.totalorder %s17, 1
        %s165 = scalar_select %p164, %s17, 1
        %s166 = smul.addr %s165, 38
        %s167 = smul.addr %s166, 8
        %s168 = scalar_lea.vmem %s0, %s167
        %v169 = vld [vmem:[%s1] sm:$0xff]
        %v170 = vld [vmem:[%s1 + $0x8] sm:$0xff]
        %v171 = vld [vmem:[%s168] sm:$0xff]
        %v172 = vld [vmem:[%s168 + $0x8] sm:$0xff]
        %v173 = vld [vmem:[%s168 + $0x10] sm:$0xff]
        %v174 = vld [vmem:[%s168 + $0x18] sm:$0xff]
        %v175 = vld [vmem:[%s168 + $0x20] sm:$0xff]
        %v176 = vld [vmem:[%s168 + $0x28] sm:$0xff]
        %v177 = vld [vmem:[%s168 + $0x30] sm:$0xff]
        %v178 = vld [vmem:[%s168 + $0x38] sm:$0xff]
        %v179 = vld [vmem:[%s168 + $0x40] sm:$0xff]
        %v180 = vld [vmem:[%s168 + $0x48] sm:$0xff]
        %v181 = vld [vmem:[%s168 + $0x50] sm:$0xff]
        %v182 = vld [vmem:[%s168 + $0x58] sm:$0xff]
        %v183 = vld [vmem:[%s168 + $0x60] sm:$0xff]
        %v184 = vld [vmem:[%s168 + $0x68] sm:$0xff]
        %v185 = vld [vmem:[%s168 + $0x70] sm:$0xff]
        %v186 = vld [vmem:[%s168 + $0x78] sm:$0xff]
        %v187 = vld [vmem:[%s168 + $0x80] sm:$0xff]
        %v188 = vld [vmem:[%s168 + $0x88] sm:$0xff]
        %v189 = vld [vmem:[%s168 + $0x90] sm:$0xff]
        %v190 = vld [vmem:[%s168 + $0x98] sm:$0xff]
        %v191 = vld [vmem:[%s168 + $0xa0] sm:$0xff]
        %v192 = vld [vmem:[%s168 + $0xa8] sm:$0xff]
        %v193 = vld [vmem:[%s168 + $0xb0] sm:$0xff]
        %v194 = vld [vmem:[%s168 + $0xb8] sm:$0xff]
        %v195 = vld [vmem:[%s168 + $0xc0] sm:$0xff]
        %v196 = vld [vmem:[%s168 + $0xc8] sm:$0xff]
        %v197 = vld [vmem:[%s168 + $0xd0] sm:$0xff]
        %v198 = vld [vmem:[%s168 + $0xd8] sm:$0xff]
        %v199 = vld [vmem:[%s168 + $0xe0] sm:$0xff]
        %v200 = vld [vmem:[%s168 + $0xe8] sm:$0xff]
        %v201 = vld [vmem:[%s168 + $0xf0] sm:$0xff]
        %v202 = vld [vmem:[%s168 + $0xf8] sm:$0xff]
        %v203 = vld [vmem:[%s168 + $0x100] sm:$0xff]
        %v204 = vld [vmem:[%s168 + $0x108] sm:$0xff]
        %v205 = vld [vmem:[%s168 + $0x110] sm:$0xff]
        %v206 = vld [vmem:[%s168 + $0x118] sm:$0xff]
        %v207 = vld [vmem:[%s168 + $0x120] sm:$0x7]
        %v208 = vld [vmem:[%s168 + $0x128] sm:$0x7]
        %v209 = vld [vmem:[%s2] sm:$0xff]
        %211 = vset.pattern.permute.xlu0 0
        %212 = vperm.xlu0 %211, %v209
        %v213 = vpop.permute.xlu0 %212
        %vm215 = vcmask 154624
        %v217 = vsel %vm215, %v170, 0
        %vm219 = vcmask 1042432
        %v221 = vsel %vm219, %v207, 0
        %v224 = vsel %vm219, %v208, 0
        %226 = vmatprep.subr.mxu0 %v202
        %227 = vmatpush1.msra.mxu0 %v201
        %228 = vmatprep.subr.mxu0 %v200
        %229 = vmatpush1.msra.mxu0 %v199
        %230 = vmatprep.subr.mxu0 %v198
        %231 = vmatpush1.msra.mxu0 %v197
        %232 = vmatprep.subr.mxu0 %v196
        %233 = vmatpush1.msra.mxu0 %v195
        %234 = vmatprep.subr.mxu0 %v194
        %235 = vmatpush1.msra.mxu0 %v193
        %236 = vmatprep.subr.mxu0 %v192
        %237 = vmatpush1.msra.mxu0 %v191
        %238 = vmatprep.subr.mxu0 %v190
        %239 = vmatpush1.msra.mxu0 %v189
        %240 = vmatprep.subr.mxu0 %v188
        %241 = vmatpush1.msra.mxu0 %v187
        %242 = vmatprep.subr.mxu0 %v186
        %243 = vmatpush1.msra.mxu0 %v185
        %244 = vmatprep.subr.mxu0 %v184
        %245 = vmatpush1.msra.mxu0 %v183
        %246 = vmatprep.subr.mxu0 %v182
        %247 = vmatpush1.msra.mxu0 %v181
        %248 = vmatprep.subr.mxu0 %v180
        %249 = vmatpush1.msra.mxu0 %v179
        %250 = vmatprep.subr.mxu0 %v178
        %251 = vmatpush1.msra.mxu0 %v177
        %252 = vmatprep.subr.mxu0 %v176
        %253 = vmatpush1.msra.mxu0 %v175
        %254 = vmatprep.subr.mxu0 %v174
        %255 = vmatpush1.msra.mxu0 %v173
        %256 = vmatprep.subr.mxu0 %v172
        %257 = vmatpush1.msra.mxu0 %v171
        %258 = vmatprep.subr.mxu0 0.0
        %259 = vmatpush2.msra.mxu0 0.0
        %260 = vmatprep.subr.mxu0 0.0
        %261 = vmatpush2.msra.mxu0 0.0
        %262 = vmatprep.subr.mxu0 0.0
        %263 = vmatpush2.msra.mxu0 0.0
        %264 = vmatprep.subr.mxu0 0.0
        %265 = vmatpush2.msra.mxu0 0.0
        %266 = vmatprep.subr.mxu0 0.0
        %267 = vmatpush2.msra.mxu0 0.0
        %268 = vmatprep.subr.mxu0 0.0
        %269 = vmatpush2.msra.mxu0 0.0
        %270 = vmatprep.subr.mxu0 0.0
        %271 = vmatpush2.msra.mxu0 0.0
        %272 = vmatprep.subr.mxu0 0.0
        %273 = vmatpush2.msra.mxu0 0.0
        %274 = vmatprep.subr.mxu0 0.0
        %275 = vmatpush2.msra.mxu0 0.0
        %276 = vmatprep.subr.mxu0 0.0
        %277 = vmatpush2.msra.mxu0 0.0
        %278 = vmatprep.subr.mxu0 0.0
        %279 = vmatpush2.msra.mxu0 0.0
        %280 = vmatprep.subr.mxu0 0.0
        %281 = vmatpush2.msra.mxu0 0.0
        %282 = vmatprep.subr.mxu0 0.0
        %283 = vmatpush2.msra.mxu0 0.0
        %284 = vmatprep.subr.mxu0 %v224
        %285 = vmatpush2.msra.mxu0 %v221
        %286 = vmatprep.subr.mxu0 %v206
        %287 = vmatpush2.msra.mxu0 %v205
        %288 = vmatprep.subr.mxu0 %v204
        %289 = vmatpush2.msra.mxu0 %v203
        %290 = vmatprep.mubr.f32.mxu0 %v217
        %291 = vmatmul.mubr.f32.gmra.mxu0 %v169
        %v292 = vpop.f32.mrf.mxu0
        %v293 = vadd.f32 %v213, %v292
        %v294 = vpop.f32.mrf.mxu0
        %v295 = vadd.f32 %v213, %v294
        %296 = vdwg.mxu0
        %v297 = vadd.f32 %v293, %v295
        %298 = vadd.xlane.f32.xlu0 %v297
        %v299 = vpop.xlane.xlu0 %298
        %v300 = vrcp.pop 256.0
        %v301 = vmul.f32 %v299, %v300
        %v302 = vsub.f32 %v293, %v301
        %v303 = vsub.f32 %v295, %v301
        %v304 = vmul.f32 %v302, %v302
        %v305 = vmul.f32 %v303, %v303
        %v306 = vadd.f32 %v304, %v305
        %307 = vadd.xlane.f32.xlu0 %v306
        %v308 = vpop.xlane.xlu0 %307
        %v309 = vmul.f32 %v308, %v300
        %v310 = vadd.f32 %v309, 1e-05
        %v311 = vrsqrt.pop %v310
        %v312 = vmul.f32 %v302, %v311
        %v313 = vmul.f32 %v303, %v311
        %v314 = vmax.f32 %v312, 0.0
        %v315 = vmax.f32 %v313, 0.0
        %316 = vst [vmem:[%s163] sm:$0xff] %v314
        %317 = vst [vmem:[%s163 + $0x8] sm:$0xff] %v315
        %s318 = sand.u32 %s93, 1
        %s319 = scalar_lea.sflag [#allocation3], %s318
        %s320 = sand.u32 %s93, 1
        %s321 = smul.addr %s320, 16
        %s322 = scalar_lea.vmem [#allocation2], %s321
        // Predicated region
        $region33: #{tpu_custom_call.1} parent=31 // pred_check
          %p323 = pneg %p103
        $region34: #{tpu_custom_call.1} parent=31 // pred_check_branch
          %325 = sbr.rel (%p323) target = $region36
        $region35: #{tpu_custom_call.1} parent=31 // pred_region
          %s327 = ssub.s32 256, 256
          %328 = vsyncadd %s319, %s327
          %s329 = smul.addr %s17, 2
          %s330 = smul.addr %s329, 128
          %s331 = scalar_lea.hbm %s3, %s330
          %s333 = sshll.u32 %s322, 4
          %s334 = int_to_ptr.vmem [resolvable:$true] %s333
          %336 = dma.vmem_to_hbm [thread:$0]  %s334, 256, %s331, %s319
        $region36: #{tpu_custom_call.1} parent=31 // pred_fallthru
          _
      $region32: #{tpu_custom_call.1} parent=5 // pred_fallthru
        _
      %p337 = scmp.le.s32.totalorder 2, %s12
      // Predicated region
      $region37: #{tpu_custom_call.1} parent=5 // pred_check
        %p338 = pneg %p337
      $region38: #{tpu_custom_call.1} parent=5 // pred_check_branch
        %340 = sbr.rel (%p338) target = $region40
      $region39: #{tpu_custom_call.1} parent=5 // pred_region
        %s341 = ssub.s32 %s12, 2
        // Predicated region
        $region41: #{tpu_custom_call.1} parent=39 // pred_check
          %p342 = pneg %p109
        $region42: #{tpu_custom_call.1} parent=39 // pred_check_branch
          %344 = sbr.rel (%p342) target = $region44
        $region43: #{tpu_custom_call.1} parent=39 // pred_region
          %s345 = sand.u32 %s94, 1
          %s346 = scalar_lea.sflag [#allocation3], %s345
          %s347 = sand.u32 %s94, 1
          %s348 = smul.addr %s347, 16
          %s349 = scalar_lea.vmem [#allocation2], %s348
          %350 = dma.done %s346, 256
        $region44: #{tpu_custom_call.1} parent=39 // pred_fallthru
          _
      $region40: #{tpu_custom_call.1} parent=5 // pred_fallthru
        _
    $region6: #{tpu_custom_call.1} parent=1 // loop_footer
      %s16 = sadd.s32 1, %s12
    $region7: #{tpu_custom_call.1} parent=1 // loop_footer_branch
      %11 = sbr.rel target = $region3
    $region8: #{tpu_custom_call.1} parent=1 // loop_exit
      _
    %351 = vsyncpa [#allocation3], 1
    %s352 = scalar_lea.sflag [#allocation3], 1
    %353 = vsyncpa %s352, 1

</llo_original>
